<compile_context>
chip_gen: v7x
topology: tpu7x:2x2x1
jax: 0.10.0
libtpu: 0.0.40
codegen_flags: <defaults>
</compile_context>

<pallas_src>
import math

import jax
import jax.numpy as jnp
from jax.experimental import pallas as pl
from jax.experimental.pallas import tpu as pltpu


def _round_up(x, m):
    return (x + m - 1) // m * m


def _const_index_map(ndim):
    zeros = (0,) * ndim
    return lambda i: zeros


def _make_kernel(pdrop: float, apply_dropout: bool, num_hidden: int, out_dim: int):
    assert 0.0 < pdrop < 1.0, "pdrop must be in (0, 1)"
    log_p = math.log(pdrop)
    log_1mp = math.log(1.0 - pdrop)
    inv_keep = 1.0 / (1.0 - pdrop)

    def _body(x_ref, u_ref, w1_ref, b1_ref, wh_ref, bh_ref,
              whead_ref, bhead_ref, out_ref):
        def dropout(h, layer):
            if not apply_dropout:
                return h
            u = u_ref[layer]                     # (TB, n_hid) f32 uniforms in [0, 1)
            return jnp.where(u >= pdrop, h * inv_keep, 0.0)

        def mask_log_prob(h):
            # Reference semantics: count exact zeros of the post-dropout activation.
            n_zero = jnp.sum((h == 0.0).astype(jnp.float32), axis=1, keepdims=True)
            n_nonzero = jnp.float32(h.shape[1]) - n_zero
            return n_zero * log_p + n_nonzero * log_1mp

        # fc1 — bf16 MXU inputs, f32 accumulation.
        h = jnp.dot(x_ref[...], w1_ref[...],
                    preferred_element_type=jnp.float32) + b1_ref[...]
        h = dropout(h, 0)
        log_mp = mask_log_prob(h)
        h = jnp.tanh(h)

        # hidden layers fc2..fc{num_layers}
        for l in range(num_hidden):
            h = jnp.dot(h.astype(jnp.bfloat16), wh_ref[l],
                        preferred_element_type=jnp.float32) + bh_ref[l]
            h = dropout(h, l + 1)
            log_mp = log_mp + mask_log_prob(h)
            h = jnp.tanh(h)

        # Fused lane-dense head: columns [0:out) = mu, [out:2*out) = sig = exp(log_std),
        # column 2*out = mask_prob, remaining lanes zero.
        head = jnp.dot(h.astype(jnp.bfloat16), whead_ref[...],
                       preferred_element_type=jnp.float32) + bhead_ref[...]
        col = jax.lax.broadcasted_iota(jnp.int32, head.shape, 1)
        mask_prob = jnp.exp(log_mp)              # (TB, 1)
        out = jnp.where(col < out_dim, head,
              jnp.where(col < 2 * out_dim, jnp.exp(head),
              jnp.where(col == 2 * out_dim, mask_prob, 0.0)))
        out_ref[...] = out

    if apply_dropout:
        return _body

    def _body_no_dropout(x_ref, w1_ref, b1_ref, wh_ref, bh_ref,
                         whead_ref, bhead_ref, out_ref):
        _body(x_ref, None, w1_ref, b1_ref, wh_ref, bh_ref,
              whead_ref, bhead_ref, out_ref)

    return _body_no_dropout


def linear_mc_drop_forward(x, params, pdrop, *, input_dim, context=None,
                           mc_drop=True, rand_mask=True, seed=0,
                           uniforms=None, tile_batch=256):
    """Pallas-backed forward of Linear_MC_Drop. Returns (mu, sig, mask_prob)."""
    x = x.reshape(-1, input_dim).astype(jnp.float32)
    if context is not None:
        x = jnp.concatenate([x, context.astype(jnp.float32)], axis=1)

    w1, b1, wh, bh, wm, bm, ws, bs = params
    batch, feat = x.shape
    n_hid = w1.shape[1]
    out_dim = wm.shape[1]
    num_hidden = wh.shape[0]
    n_drop_layers = num_hidden + 1
    apply_dropout = bool(mc_drop and rand_mask)

    # --- Fused + lane-padded head weights: [ mu | log_std | (mask col) | 0-pad ].
    out_w = max(128, _round_up(2 * out_dim + 1, 128))
    w_head = jnp.zeros((n_hid, out_w), jnp.float32)
    w_head = w_head.at[:, :out_dim].set(wm).at[:, out_dim:2 * out_dim].set(ws)
    b_head = jnp.zeros((1, out_w), jnp.float32)
    b_head = b_head.at[:, :out_dim].set(bm).at[:, out_dim:2 * out_dim].set(bs)

    # --- Batch tiling: 1-D grid, tiles double-buffered, weights resident.
    tb = min(int(tile_batch), _round_up(batch, 8))
    pb = _round_up(batch, tb)
    num_tiles = pb // tb
    if pb != batch:
        x = jnp.pad(x, ((0, pb - batch), (0, 0)))

    # --- bf16 MXU operands (accumulation stays f32 inside the kernel).
    # NOTE: for realistic widths, also pad n_hid / feat to multiples of 128 (with
    # mask-stat counting restricted to the logical columns); negligible at these sizes.
    x_bf = x.astype(jnp.bfloat16)
    w1_bf = w1.astype(jnp.bfloat16)
    wh_bf = wh.astype(jnp.bfloat16)
    w_head_bf = w_head.astype(jnp.bfloat16)
    b1_f = b1.astype(jnp.float32)
    bh_f = bh.astype(jnp.float32)

    args = [x_bf]
    in_specs = [pl.BlockSpec((tb, feat), lambda i: (i, 0))]

    if apply_dropout:
        if uniforms is None:
            uniforms = jax.random.uniform(jax.random.PRNGKey(seed),
                                          (n_drop_layers, batch, n_hid), jnp.float32)
        u = jnp.asarray(uniforms, jnp.float32)
        assert u.shape == (n_drop_layers, batch, n_hid)
        if pb != batch:
            u = jnp.pad(u, ((0, 0), (0, pb - batch), (0, 0)))
        args.append(u)
        in_specs.append(pl.BlockSpec((n_drop_layers, tb, n_hid), lambda i: (0, i, 0)))

    weights = (w1_bf, b1_f, wh_bf, bh_f, w_head_bf, b_head)
    for a in weights:
        args.append(a)
        in_specs.append(pl.BlockSpec(a.shape, _const_index_map(a.ndim)))

    out_spec = pl.BlockSpec((tb, out_w), lambda i: (i, 0))
    kernel = _make_kernel(float(pdrop), apply_dropout, int(num_hidden), int(out_dim))

    # --- Scheduling hints.
    flops = 2 * pb * (feat * n_hid + num_hidden * n_hid * n_hid + n_hid * out_w)
    transcendentals = pb * (n_hid * n_drop_layers + out_w + 1)
    bytes_accessed = sum(int(a.nbytes) for a in args) + pb * out_w * 4
    cost = pl.CostEstimate(flops=int(flops), transcendentals=int(transcendentals),
                           bytes_accessed=int(bytes_accessed))

    resident_bytes = sum(int(a.nbytes) for a in weights)
    tile_bytes = tb * feat * 2 + tb * out_w * 4
    if apply_dropout:
        tile_bytes += n_drop_layers * tb * n_hid * 4
    vmem_limit = int(min(max(2 * (resident_bytes + 2 * tile_bytes) + (8 << 20), 16 << 20),
                         96 << 20))

    out = pl.pallas_call(
        kernel,
        out_shape=jax.ShapeDtypeStruct((pb, out_w), jnp.float32),
        grid=(num_tiles,),
        in_specs=in_specs,
        out_specs=out_spec,
        compiler_params=pltpu.CompilerParams(
            dimension_semantics=("parallel",),
            vmem_limit_bytes=vmem_limit),
        cost_estimate=cost,
    )(*args)

    mu = out[:batch, :out_dim]
    sig = out[:batch, out_dim:2 * out_dim]
    mask_prob = out[:batch, 2 * out_dim]
    return mu, sig, mask_prob


def init_params(key, input_dim, context_dim, n_hid, output_dim, num_layers=2):
    """Deterministic nn.Linear-style init; weights stored as (in, out)."""
    assert num_layers >= 2

    def linear(k, fan_in, fan_out):
        kw, kb = jax.random.split(k)
        bound = 1.0 / math.sqrt(fan_in)
        w = jax.random.uniform(kw, (fan_in, fan_out), jnp.float32, -bound, bound)
        b = jax.random.uniform(kb, (1, fan_out), jnp.float32, -bound, bound)
        return w, b

    keys = jax.random.split(key, num_layers + 2)
    w1, b1 = linear(keys[0], input_dim + context_dim, n_hid)
    whs, bhs = [], []
    for i in range(num_layers - 1):
        w, b = linear(keys[1 + i], n_hid, n_hid)
        whs.append(w)
        bhs.append(b)
    wh = jnp.stack(whs)          # (num_layers-1, n_hid, n_hid)
    bh = jnp.stack(bhs)          # (num_layers-1, 1, n_hid)
    wm, bm = linear(keys[num_layers], n_hid, output_dim)
    ws, bs = linear(keys[num_layers + 1], n_hid, output_dim)
    return (w1, b1, wh, bh, wm, bm, ws, bs)


def _ref_forward(x, context, params, pdrop, input_dim, uniforms=None):
    """Pure-JAX reference mirroring the kernel math (bf16 matmuls, f32 accumulate)."""
    w1, b1, wh, bh, wm, bm, ws, bs = params
    inv_keep = 1.0 / (1.0 - pdrop)

    def dot_bf16(a, w):
        return jnp.dot(a.astype(jnp.bfloat16), w.astype(jnp.bfloat16),
                       preferred_element_type=jnp.float32)

    def dropout(h, layer):
        if uniforms is None:
            return h
        return jnp.where(uniforms[layer] >= pdrop, h * inv_keep, 0.0)

    h = x.reshape(-1, input_dim).astype(jnp.float32)
    if context is not None:
        h = jnp.concatenate([h, context.astype(jnp.float32)], axis=1)
    h = dot_bf16(h, w1) + b1
    h = dropout(h, 0)
    nz = jnp.sum(h == 0, axis=1).astype(jnp.float32)
    mp = pdrop ** nz * (1 - pdrop) ** (h.shape[1] - nz)
    h = jnp.tanh(h)
    for l in range(wh.shape[0]):
        h = dot_bf16(h, wh[l]) + bh[l]
        h = dropout(h, l + 1)
        nz = jnp.sum(h == 0, axis=1).astype(jnp.float32)
        mp = mp * pdrop ** nz * (1 - pdrop) ** (h.shape[1] - nz)
        h = jnp.tanh(h)
    mu = dot_bf16(h, wm) + bm
    sig = jnp.exp(dot_bf16(h, ws) + bs)
    return mu, sig, mp


if __name__ == "__main__":
    key = jax.random.PRNGKey(0)
    input_dim, context_dim, n_hid, output_dim = 8, 4, 32, 4
    num_layers, batch, pdrop = 2, 8, 0.3

    kx, kc, kp, ku = jax.random.split(key, 4)
    x = jax.random.normal(kx, (batch, input_dim), jnp.float32)
    context = jax.random.normal(kc, (batch, context_dim), jnp.float32)
    params = init_params(kp, input_dim, context_dim, n_hid, output_dim, num_layers)

    # MC-dropout path (host-supplied uniforms => reproducible against pure JAX).
    uniforms = jax.random.uniform(ku, (num_layers, batch, n_hid), jnp.float32)
    mu, sig, mask_prob = linear_mc_drop_forward(
        x, params, pdrop, input_dim=input_dim, context=context,
        mc_drop=True, rand_mask=True, uniforms=uniforms)
    jax.block_until_ready((mu, sig, mask_prob))
    assert mu.shape == (batch, output_dim)
    assert sig.shape == (batch, output_dim)
    assert mask_prob.shape == (batch,)
    mu_r, sig_r, mp_r = _ref_forward(x, context, params, pdrop, input_dim,
                                     uniforms=uniforms)
    assert jnp.allclose(mu, mu_r, rtol=5e-3, atol=1e-4)
    assert jnp.allclose(sig, sig_r, rtol=5e-3, atol=1e-4)
    assert jnp.allclose(mask_prob, mp_r, rtol=5e-3, atol=1e-30)

    # Deterministic path (dropout disabled) cross-checked against pure JAX.
    mu_d, sig_d, mp_d = linear_mc_drop_forward(
        x, params, pdrop, input_dim=input_dim, context=context,
        mc_drop=False, rand_mask=False)
    jax.block_until_ready((mu_d, sig_d, mp_d))
    mu_dr, sig_dr, mp_dr = _ref_forward(x, context, params, pdrop, input_dim,
                                        uniforms=None)
    assert jnp.allclose(mu_d, mu_dr, rtol=5e-3, atol=1e-4)
    assert jnp.allclose(sig_d, sig_dr, rtol=5e-3, atol=1e-4)
    assert jnp.allclose(mp_d, mp_dr, rtol=5e-3, atol=1e-30)

    print("KERNEL_OK")
</pallas_src>

<mosaic_0001>
module attributes {stable_mosaic.version = 11 : i64} {
  func.func @_body(%arg0: i32, %arg1: memref<8x12xbf16, #tpu.memory_space<vmem>>, %arg2: memref<2x8x32xf32, #tpu.memory_space<vmem>>, %arg3: memref<12x32xbf16, #tpu.memory_space<vmem>>, %arg4: memref<1x32xf32, #tpu.memory_space<vmem>>, %arg5: memref<1x32x32xbf16, #tpu.memory_space<vmem>>, %arg6: memref<1x1x32xf32, #tpu.memory_space<vmem>>, %arg7: memref<32x128xbf16, #tpu.memory_space<vmem>>, %arg8: memref<1x128xf32, #tpu.memory_space<vmem>>, %arg9: memref<8x128xf32, #tpu.memory_space<vmem>>) attributes {dimension_semantics = [#tpu.dimension_semantics<parallel>], iteration_bounds = array<i64: 1>, scalar_prefetch = 0 : i64, scratch_operands = 0 : i64, tpu.core_type = #tpu.core_type<tc>, window_params = [{transform_indices = @transform_0, window_bounds = array<i64: 8, 12>}, {transform_indices = @transform_1, window_bounds = array<i64: 2, 8, 32>}, {pipeline_mode = #tpu.pipeline_mode<synchronous>, transform_indices = @transform_2, window_bounds = array<i64: 12, 32>}, {pipeline_mode = #tpu.pipeline_mode<synchronous>, transform_indices = @transform_3, window_bounds = array<i64: 1, 32>}, {pipeline_mode = #tpu.pipeline_mode<synchronous>, transform_indices = @transform_4, window_bounds = array<i64: 1, 32, 32>}, {pipeline_mode = #tpu.pipeline_mode<synchronous>, transform_indices = @transform_5, window_bounds = array<i64: 1, 1, 32>}, {pipeline_mode = #tpu.pipeline_mode<synchronous>, transform_indices = @transform_6, window_bounds = array<i64: 32, 128>}, {pipeline_mode = #tpu.pipeline_mode<synchronous>, transform_indices = @transform_7, window_bounds = array<i64: 1, 128>}, {transform_indices = @transform_8, window_bounds = array<i64: 8, 128>}]} {
    %c0 = arith.constant 0 : index
    %c0_0 = arith.constant 0 : index
    %0 = vector.load %arg1[%c0, %c0_0] : memref<8x12xbf16, #tpu.memory_space<vmem>>, vector<8x12xbf16>
    %c0_1 = arith.constant 0 : index
    %c0_2 = arith.constant 0 : index
    %1 = vector.load %arg3[%c0_1, %c0_2] : memref<12x32xbf16, #tpu.memory_space<vmem>>, vector<12x32xbf16>
    %cst = arith.constant dense<0.000000e+00> : vector<8x32xf32>
    %2 = tpu.matmul %0, %1, %cst {dimension_numbers = #tpu.dot_dimension_numbers<[1], [0], [0], [1], [0, 0, 1, 1], [], []>} : vector<8x12xbf16>, vector<12x32xbf16>, vector<8x32xf32> -> vector<8x32xf32>
    %c0_3 = arith.constant 0 : index
    %c0_4 = arith.constant 0 : index
    %3 = vector.load %arg4[%c0_3, %c0_4] : memref<1x32xf32, #tpu.memory_space<vmem>>, vector<1x32xf32>
    %4 = vector.broadcast %3 : vector<1x32xf32> to vector<8x32xf32>
    %5 = arith.addf %2, %4 : vector<8x32xf32>
    %c0_5 = arith.constant 0 : index
    %c0_6 = arith.constant 0 : index
    %c0_7 = arith.constant 0 : index
    %6 = vector.load %arg2[%c0_5, %c0_6, %c0_7] : memref<2x8x32xf32, #tpu.memory_space<vmem>>, vector<1x8x32xf32>
    %7 = vector.shape_cast %6 : vector<1x8x32xf32> to vector<8x32xf32>
    %cst_8 = arith.constant 3.000000e-01 : f32
    %8 = vector.broadcast %cst_8 : f32 to vector<8x32xf32>
    %9 = arith.cmpf oge, %7, %8 : vector<8x32xf32>
    %cst_9 = arith.constant 1.42857146 : f32
    %10 = vector.broadcast %cst_9 : f32 to vector<8x32xf32>
    %11 = arith.mulf %5, %10 : vector<8x32xf32>
    %cst_10 = arith.constant 0.000000e+00 : f32
    %12 = vector.broadcast %cst_10 : f32 to vector<8x32xf32>
    %13 = arith.select %9, %11, %12 : vector<8x32xi1>, vector<8x32xf32>
    %cst_11 = arith.constant 0.000000e+00 : f32
    %14 = vector.broadcast %cst_11 : f32 to vector<8x32xf32>
    %15 = arith.cmpf oeq, %13, %14 : vector<8x32xf32>
    %16 = arith.extui %15 : vector<8x32xi1> to vector<8x32xi32>
    %17 = arith.sitofp %16 : vector<8x32xi32> to vector<8x32xf32>
    %cst_12 = arith.constant dense<0.000000e+00> : vector<8xf32>
    %18 = vector.multi_reduction <add>, %17, %cst_12 [1] : vector<8x32xf32> to vector<8xf32>
    %19 = vector.shape_cast %18 : vector<8xf32> to vector<8x1xf32>
    %cst_13 = arith.constant 3.200000e+01 : f32
    %20 = vector.broadcast %cst_13 : f32 to vector<8x1xf32>
    %21 = arith.subf %20, %19 : vector<8x1xf32>
    %cst_14 = arith.constant -1.20397282 : f32
    %22 = vector.broadcast %cst_14 : f32 to vector<8x1xf32>
    %23 = arith.mulf %19, %22 : vector<8x1xf32>
    %cst_15 = arith.constant -0.356674939 : f32
    %24 = vector.broadcast %cst_15 : f32 to vector<8x1xf32>
    %25 = arith.mulf %21, %24 : vector<8x1xf32>
    %26 = arith.addf %23, %25 : vector<8x1xf32>
    %27 = math.tanh %13 : vector<8x32xf32>
    %28 = arith.truncf %27 : vector<8x32xf32> to vector<8x32xbf16>
    %c0_16 = arith.constant 0 : index
    %c0_17 = arith.constant 0 : index
    %c0_18 = arith.constant 0 : index
    %29 = vector.load %arg5[%c0_16, %c0_17, %c0_18] : memref<1x32x32xbf16, #tpu.memory_space<vmem>>, vector<1x32x32xbf16>
    %30 = vector.shape_cast %29 : vector<1x32x32xbf16> to vector<32x32xbf16>
    %cst_19 = arith.constant dense<0.000000e+00> : vector<8x32xf32>
    %31 = tpu.matmul %28, %30, %cst_19 {dimension_numbers = #tpu.dot_dimension_numbers<[1], [0], [0], [1], [0, 0, 1, 1], [], []>} : vector<8x32xbf16>, vector<32x32xbf16>, vector<8x32xf32> -> vector<8x32xf32>
    %c0_20 = arith.constant 0 : index
    %c0_21 = arith.constant 0 : index
    %c0_22 = arith.constant 0 : index
    %32 = vector.load %arg6[%c0_20, %c0_21, %c0_22] : memref<1x1x32xf32, #tpu.memory_space<vmem>>, vector<1x1x32xf32>
    %33 = vector.shape_cast %32 : vector<1x1x32xf32> to vector<1x32xf32>
    %34 = vector.broadcast %33 : vector<1x32xf32> to vector<8x32xf32>
    %35 = arith.addf %31, %34 : vector<8x32xf32>
    %c1 = arith.constant 1 : index
    %c0_23 = arith.constant 0 : index
    %c0_24 = arith.constant 0 : index
    %36 = vector.load %arg2[%c1, %c0_23, %c0_24] : memref<2x8x32xf32, #tpu.memory_space<vmem>>, vector<1x8x32xf32>
    %37 = vector.shape_cast %36 : vector<1x8x32xf32> to vector<8x32xf32>
    %cst_25 = arith.constant 3.000000e-01 : f32
    %38 = vector.broadcast %cst_25 : f32 to vector<8x32xf32>
    %39 = arith.cmpf oge, %37, %38 : vector<8x32xf32>
    %cst_26 = arith.constant 1.42857146 : f32
    %40 = vector.broadcast %cst_26 : f32 to vector<8x32xf32>
    %41 = arith.mulf %35, %40 : vector<8x32xf32>
    %cst_27 = arith.constant 0.000000e+00 : f32
    %42 = vector.broadcast %cst_27 : f32 to vector<8x32xf32>
    %43 = arith.select %39, %41, %42 : vector<8x32xi1>, vector<8x32xf32>
    %cst_28 = arith.constant 0.000000e+00 : f32
    %44 = vector.broadcast %cst_28 : f32 to vector<8x32xf32>
    %45 = arith.cmpf oeq, %43, %44 : vector<8x32xf32>
    %46 = arith.extui %45 : vector<8x32xi1> to vector<8x32xi32>
    %47 = arith.sitofp %46 : vector<8x32xi32> to vector<8x32xf32>
    %cst_29 = arith.constant dense<0.000000e+00> : vector<8xf32>
    %48 = vector.multi_reduction <add>, %47, %cst_29 [1] : vector<8x32xf32> to vector<8xf32>
    %49 = vector.shape_cast %48 : vector<8xf32> to vector<8x1xf32>
    %cst_30 = arith.constant 3.200000e+01 : f32
    %50 = vector.broadcast %cst_30 : f32 to vector<8x1xf32>
    %51 = arith.subf %50, %49 : vector<8x1xf32>
    %cst_31 = arith.constant -1.20397282 : f32
    %52 = vector.broadcast %cst_31 : f32 to vector<8x1xf32>
    %53 = arith.mulf %49, %52 : vector<8x1xf32>
    %cst_32 = arith.constant -0.356674939 : f32
    %54 = vector.broadcast %cst_32 : f32 to vector<8x1xf32>
    %55 = arith.mulf %51, %54 : vector<8x1xf32>
    %56 = arith.addf %53, %55 : vector<8x1xf32>
    %57 = arith.addf %26, %56 : vector<8x1xf32>
    %58 = math.tanh %43 : vector<8x32xf32>
    %59 = arith.truncf %58 : vector<8x32xf32> to vector<8x32xbf16>
    %c0_33 = arith.constant 0 : index
    %c0_34 = arith.constant 0 : index
    %60 = vector.load %arg7[%c0_33, %c0_34] : memref<32x128xbf16, #tpu.memory_space<vmem>>, vector<32x128xbf16>
    %cst_35 = arith.constant dense<0.000000e+00> : vector<8x128xf32>
    %61 = tpu.matmul %59, %60, %cst_35 {dimension_numbers = #tpu.dot_dimension_numbers<[1], [0], [0], [1], [0, 0, 1, 1], [], []>} : vector<8x32xbf16>, vector<32x128xbf16>, vector<8x128xf32> -> vector<8x128xf32>
    %c0_36 = arith.constant 0 : index
    %c0_37 = arith.constant 0 : index
    %62 = vector.load %arg8[%c0_36, %c0_37] : memref<1x128xf32, #tpu.memory_space<vmem>>, vector<1x128xf32>
    %63 = vector.broadcast %62 : vector<1x128xf32> to vector<8x128xf32>
    %64 = arith.addf %61, %63 : vector<8x128xf32>
    %65 = tpu.iota {dimensions = array<i32: 1>} : vector<8x128xi32>
    %66 = math.exp %57 : vector<8x1xf32>
    %c4_i32 = arith.constant 4 : i32
    %67 = vector.broadcast %c4_i32 : i32 to vector<8x128xi32>
    %68 = arith.cmpi slt, %65, %67 : vector<8x128xi32>
    %c8_i32 = arith.constant 8 : i32
    %69 = vector.broadcast %c8_i32 : i32 to vector<8x128xi32>
    %70 = arith.cmpi slt, %65, %69 : vector<8x128xi32>
    %71 = math.exp %64 : vector<8x128xf32>
    %c8_i32_38 = arith.constant 8 : i32
    %72 = vector.broadcast %c8_i32_38 : i32 to vector<8x128xi32>
    %73 = arith.cmpi eq, %65, %72 : vector<8x128xi32>
    %cst_39 = arith.constant 0.000000e+00 : f32
    %74 = vector.shape_cast %66 : vector<8x1xf32> to vector<8x1xf32>
    %75 = vector.broadcast %74 : vector<8x1xf32> to vector<8x128xf32>
    %76 = vector.broadcast %cst_39 : f32 to vector<8x128xf32>
    %77 = arith.select %73, %75, %76 : vector<8x128xi1>, vector<8x128xf32>
    %78 = arith.select %70, %71, %77 : vector<8x128xi1>, vector<8x128xf32>
    %79 = arith.select %68, %64, %78 : vector<8x128xi1>, vector<8x128xf32>
    %c0_40 = arith.constant 0 : index
    %c0_41 = arith.constant 0 : index
    %80 = vector.load %arg9[%c0_40, %c0_41] : memref<8x128xf32, #tpu.memory_space<vmem>>, vector<8x128xf32>
    tpu.vector_store %arg9[%c0_40, %c0_41], %79 {strides = array<i32>} : memref<8x128xf32, #tpu.memory_space<vmem>>, vector<8x128xf32>,
    return
  }
  func.func @transform_0(%arg0: i32) -> (i32, i32) {
    %c0_i32 = arith.constant 0 : i32
    %c0_i32_0 = arith.constant 0 : i32
    return %arg0, %c0_i32 : i32, i32
  }
  func.func @transform_1(%arg0: i32) -> (i32, i32, i32) {
    %c0_i32 = arith.constant 0 : i32
    %c0_i32_0 = arith.constant 0 : i32
    %c0_i32_1 = arith.constant 0 : i32
    return %c0_i32, %arg0, %c0_i32_0 : i32, i32, i32
  }
  func.func @transform_2(%arg0: i32) -> (i32, i32) {
    %c0_i32 = arith.constant 0 : i32
    %c0_i32_0 = arith.constant 0 : i32
    %c0_i32_1 = arith.constant 0 : i32
    return %c0_i32, %c0_i32_0 : i32, i32
  }
  func.func @transform_3(%arg0: i32) -> (i32, i32) {
    %c0_i32 = arith.constant 0 : i32
    %c0_i32_0 = arith.constant 0 : i32
    %c0_i32_1 = arith.constant 0 : i32
    return %c0_i32, %c0_i32_0 : i32, i32
  }
  func.func @transform_4(%arg0: i32) -> (i32, i32, i32) {
    %c0_i32 = arith.constant 0 : i32
    %c0_i32_0 = arith.constant 0 : i32
    %c0_i32_1 = arith.constant 0 : i32
    %c0_i32_2 = arith.constant 0 : i32
    return %c0_i32, %c0_i32_0, %c0_i32_1 : i32, i32, i32
  }
  func.func @transform_5(%arg0: i32) -> (i32, i32, i32) {
    %c0_i32 = arith.constant 0 : i32
    %c0_i32_0 = arith.constant 0 : i32
    %c0_i32_1 = arith.constant 0 : i32
    %c0_i32_2 = arith.constant 0 : i32
    return %c0_i32, %c0_i32_0, %c0_i32_1 : i32, i32, i32
  }
  func.func @transform_6(%arg0: i32) -> (i32, i32) {
    %c0_i32 = arith.constant 0 : i32
    %c0_i32_0 = arith.constant 0 : i32
    %c0_i32_1 = arith.constant 0 : i32
    return %c0_i32, %c0_i32_0 : i32, i32
  }
  func.func @transform_7(%arg0: i32) -> (i32, i32) {
    %c0_i32 = arith.constant 0 : i32
    %c0_i32_0 = arith.constant 0 : i32
    %c0_i32_1 = arith.constant 0 : i32
    return %c0_i32, %c0_i32_0 : i32, i32
  }
  func.func @transform_8(%arg0: i32) -> (i32, i32) {
    %c0_i32 = arith.constant 0 : i32
    %c0_i32_0 = arith.constant 0 : i32
    return %arg0, %c0_i32 : i32, i32
  }
}

</mosaic_0001>

<llo_original>
// kernel: tpu_custom_call.1
$region0: #{tpu_custom_call.1}
  #allocation0 [shape = 'u32[]', space=smem, size = 0x4, offset = 0x4, fixed_abs, tag = 'smem constant byte address 0x4 - core index']
  #allocation1 [shape = 'u32[144,128]{1,0:T(1,128)}', space=vmem, size = 0x12000, scoped, tag = 'internal scratch']
  %s0 = inlined_call_operand.hbm [shape: bf16[8,12], index: 0, kind: input, shape index: {}]
  %s1 = inlined_call_operand.hbm [shape: f32[2,8,32], index: 1, kind: input, shape index: {}]
  %s2 = inlined_call_operand.hbm [shape: bf16[12,32], index: 2, kind: input, shape index: {}]
  %s3 = inlined_call_operand.vmem [shape: f32[1,32], index: 3, kind: input, shape index: {}]
  %s4 = inlined_call_operand.hbm [shape: bf16[1,32,32], index: 4, kind: input, shape index: {}]
  %s5 = inlined_call_operand.vmem [shape: f32[1,1,32], index: 5, kind: input, shape index: {}]
  %s6 = inlined_call_operand.vmem [shape: bf16[32,128], index: 6, kind: input, shape index: {}]
  %s7 = inlined_call_operand.vmem [shape: f32[1,128], index: 7, kind: input, shape index: {}]
  %s8 = inlined_call_operand.hbm [shape: f32[8,128], index: 8, kind: output, shape index: {}]
  %s9 = sld [smem:[#allocation0]]
  $region58: #{tpu_custom_call.1} parent=0
    _
  %s11 = ssub.s32 1, %s9
  %s12 = scalar_select 0, %s11, %s9
  $region1: #{tpu_custom_call.1} parent=0
    #allocation2 [shape = 'u8[2048]{0}', space=vmem, size = 0x800, scoped, tag = 'input window, operand 0, single buffered']
    #allocation3 [shape = 's32[1]{0}', space=sflag, size = 0x4, scoped, tag = 'scoped memory for tpu_custom_call.1']
    #allocation4 [shape = 's32[1]{0}', space=sflag, size = 0x4, scoped, tag = 'scoped memory for tpu_custom_call.1']
    #allocation5 [shape = 'u8[8192]{0}', space=vmem, size = 0x2000, scoped, tag = 'input window, operand 1, single buffered']
    #allocation6 [shape = 's32[1]{0}', space=sflag, size = 0x4, scoped, tag = 'scoped memory for tpu_custom_call.1']
    #allocation7 [shape = 'u8[4096]{0}', space=vmem, size = 0x1000, scoped, tag = 'input window, operand 2, single buffered']
    #allocation8 [shape = 'u8[8192]{0}', space=vmem, size = 0x2000, scoped, tag = 'input window, operand 4, single buffered']
    #allocation9 [shape = 's32[1]{0}', space=sflag, size = 0x4, scoped, tag = 'scoped memory for tpu_custom_call.1']
    #allocation10 [shape = 'u8[4096]{0}', space=vmem, size = 0x1000, scoped, tag = 'output window, operand 0, single buffered']
    %13 = vsyncpa [#allocation3], 0
    %14 = vsyncpa [#allocation6], 0
    %15 = vsyncpa [#allocation9], 0
    %16 = vsyncpa [#allocation4], 0
    // Predicated region
    $region2: #{tpu_custom_call.1} parent=1 // pred_check
      _
    $region3: #{tpu_custom_call.1} parent=1 // pred_check_branch
      %18 = sbr.rel (0) target = $region5
    $region4: #{tpu_custom_call.1} parent=1 // pred_region
      %s20 = ssub.s32 64, 64
      %21 = vsyncadd [#allocation3], %s20
      %s23 = sshll.u32 [#allocation2], 4
      %s24 = int_to_ptr.vmem [resolvable:$true] %s23
      %26 = dma.hbm_to_vmem [thread:$0]  %s0, 64, %s24, [#allocation3]
    $region5: #{tpu_custom_call.1} parent=1 // pred_fallthru
      _
    // Predicated region
    $region6: #{tpu_custom_call.1} parent=1 // pred_check
      _
    $region7: #{tpu_custom_call.1} parent=1 // pred_check_branch
      %28 = sbr.rel (0) target = $region9
    $region8: #{tpu_custom_call.1} parent=1 // pred_region
      %s30 = ssub.s32 256, 256
      %31 = vsyncadd [#allocation6], %s30
      %s32 = sshll.u32 [#allocation5], 4
      %s33 = int_to_ptr.vmem [resolvable:$true] %s32
      %38 = dma.hbm_to_vmem [thread:$0]  %s1, 256, %s33, [#allocation6], 128, 128, 8
    $region9: #{tpu_custom_call.1} parent=1 // pred_fallthru
      _
    // Predicated region
    $region10: #{tpu_custom_call.1} parent=1 // pred_check
      _
    $region11: #{tpu_custom_call.1} parent=1 // pred_check_branch
      %40 = sbr.rel (0) target = $region13
    $region12: #{tpu_custom_call.1} parent=1 // pred_region
      %s42 = ssub.s32 128, 128
      %43 = vsyncadd [#allocation6], %s42
      %s44 = sshll.u32 [#allocation7], 4
      %s45 = int_to_ptr.vmem [resolvable:$true] %s44
      %50 = dma.hbm_to_vmem [thread:$0]  %s2, 128, %s45, [#allocation6], 64, 64, 4
    $region13: #{tpu_custom_call.1} parent=1 // pred_fallthru
      _
    // Predicated region
    $region14: #{tpu_custom_call.1} parent=1 // pred_check
      _
    $region15: #{tpu_custom_call.1} parent=1 // pred_check_branch
      %52 = sbr.rel (0) target = $region17
    $region16: #{tpu_custom_call.1} parent=1 // pred_region
      _
    $region17: #{tpu_custom_call.1} parent=1 // pred_fallthru
      _
    // Predicated region
    $region18: #{tpu_custom_call.1} parent=1 // pred_check
      _
    $region19: #{tpu_custom_call.1} parent=1 // pred_check_branch
      %54 = sbr.rel (0) target = $region21
    $region20: #{tpu_custom_call.1} parent=1 // pred_region
      %s56 = ssub.s32 256, 256
      %57 = vsyncadd [#allocation9], %s56
      %s58 = sshll.u32 [#allocation8], 4
      %s59 = int_to_ptr.vmem [resolvable:$true] %s58
      %64 = dma.hbm_to_vmem [thread:$0]  %s4, 256, %s59, [#allocation9], 64, 64, 4
    $region21: #{tpu_custom_call.1} parent=1 // pred_fallthru
      _
    // Predicated region
    $region22: #{tpu_custom_call.1} parent=1 // pred_check
      _
    $region23: #{tpu_custom_call.1} parent=1 // pred_check_branch
      %66 = sbr.rel (0) target = $region25
    $region24: #{tpu_custom_call.1} parent=1 // pred_region
      _
    $region25: #{tpu_custom_call.1} parent=1 // pred_fallthru
      _
    // Predicated region
    $region26: #{tpu_custom_call.1} parent=1 // pred_check
      _
    $region27: #{tpu_custom_call.1} parent=1 // pred_check_branch
      %68 = sbr.rel (0) target = $region29
    $region28: #{tpu_custom_call.1} parent=1 // pred_region
      _
    $region29: #{tpu_custom_call.1} parent=1 // pred_fallthru
      _
    // Predicated region
    $region30: #{tpu_custom_call.1} parent=1 // pred_check
      _
    $region31: #{tpu_custom_call.1} parent=1 // pred_check_branch
      %70 = sbr.rel (0) target = $region33
    $region32: #{tpu_custom_call.1} parent=1 // pred_region
      _
    $region33: #{tpu_custom_call.1} parent=1 // pred_fallthru
      _
    // Predicated region
    $region34: #{tpu_custom_call.1} parent=1 // pred_check
      _
    $region35: #{tpu_custom_call.1} parent=1 // pred_check_branch
      %72 = sbr.rel (0) target = $region37
    $region36: #{tpu_custom_call.1} parent=1 // pred_region
      %73 = dma.done [#allocation3], 64
    $region37: #{tpu_custom_call.1} parent=1 // pred_fallthru
      _
    // Predicated region
    $region38: #{tpu_custom_call.1} parent=1 // pred_check
      _
    $region39: #{tpu_custom_call.1} parent=1 // pred_check_branch
      %75 = sbr.rel (0) target = $region41
    $region40: #{tpu_custom_call.1} parent=1 // pred_region
      %76 = dma.done [#allocation6], 256
    $region41: #{tpu_custom_call.1} parent=1 // pred_fallthru
      _
    // Predicated region
    $region42: #{tpu_custom_call.1} parent=1 // pred_check
      _
    $region43: #{tpu_custom_call.1} parent=1 // pred_check_branch
      %78 = sbr.rel (0) target = $region45
    $region44: #{tpu_custom_call.1} parent=1 // pred_region
      %79 = dma.done [#allocation6], 128
    $region45: #{tpu_custom_call.1} parent=1 // pred_fallthru
      _
    // Predicated region
    $region46: #{tpu_custom_call.1} parent=1 // pred_check
      _
    $region47: #{tpu_custom_call.1} parent=1 // pred_check_branch
      %81 = sbr.rel (0) target = $region49
    $region48: #{tpu_custom_call.1} parent=1 // pred_region
      %82 = dma.done [#allocation9], 256
    $region49: #{tpu_custom_call.1} parent=1 // pred_fallthru
      _
    %v84 = vld [vmem:[#allocation2] sm:$0xf]
    %v85 = vld [vmem:[#allocation7] sm:$0xf]
    %v86 = vld [vmem:[#allocation7 + $0x4] sm:$0x3]
    %v87 = vld [vmem:[%s3] sm:$0x1]
    %v89 = vlaneseq
    %v90 = vshrl.u32 %v89, 7
    %v91 = vsub.s32 0, %v90
    %v92 = vrot.slane %v87, %v91
    %v96 = vunpack.c.l.b16 %v85
    %v97 = vunpack.c.l.b16 %v86
    %v98 = vpack.c.b16 %v97, %v96
    %vm99 = vcmask 97280
    %v101 = vsel %vm99, %v84, 0
    %vm103 = vcmask 1045504
    %v105 = vsel %vm103, %v98, 0
    %107 = vmatprep.subr.bf16.mxu0 0
    %108 = vmatpush1.bf16.msra.mxu0 %v105
    %109 = vmatprep.subr.bf16.mxu0 0
    %110 = vmatpush1.bf16.msra.mxu0 0
    %111 = vmatprep.subr.bf16.mxu0 0
    %112 = vmatpush1.bf16.msra.mxu0 0
    %113 = vmatprep.subr.bf16.mxu0 0
    %114 = vmatpush1.bf16.msra.mxu0 0
    %115 = vmatprep.subr.bf16.mxu0 0
    %116 = vmatpush1.bf16.msra.mxu0 0
    %117 = vmatprep.subr.bf16.mxu0 0
    %118 = vmatpush1.bf16.msra.mxu0 0
    %119 = vmatprep.subr.bf16.mxu0 0
    %120 = vmatpush1.bf16.msra.mxu0 0
    %121 = vmatprep.subr.bf16.mxu0 0
    %122 = vmatpush1.bf16.msra.mxu0 0
    %123 = vmatprep.subr.bf16.mxu0 0
    %124 = vmatpush1.bf16.msra.mxu0 0
    %125 = vmatprep.subr.bf16.mxu0 0
    %126 = vmatpush1.bf16.msra.mxu0 0
    %127 = vmatprep.subr.bf16.mxu0 0
    %128 = vmatpush1.bf16.msra.mxu0 0
    %129 = vmatprep.subr.bf16.mxu0 0
    %130 = vmatpush1.bf16.msra.mxu0 0
    %131 = vmatprep.subr.bf16.mxu0 0
    %132 = vmatpush1.bf16.msra.mxu0 0
    %133 = vmatprep.subr.bf16.mxu0 0
    %134 = vmatpush1.bf16.msra.mxu0 0
    %135 = vmatprep.subr.bf16.mxu0 0
    %136 = vmatpush1.bf16.msra.mxu0 0
    %137 = vmatprep.subr.bf16.mxu0 0
    %138 = vmatpush1.bf16.msra.mxu0 0
    %139 = vmatprep.mubr.bf16.mxu0 0
    %140 = vmatmul.mubr.bf16.gmra.mrb[0].mxu0 %v101
    %v141 = vpop.f32.mrb[0].mxu0
    %v142 = vadd.f32 %v92, %v141
    %v143 = vpop.f32.mrb[0].mxu0
    %v144 = vpop.f32.mrb[0].mxu0
    %v145 = vpop.f32.mrb[0].mxu0
    %146 = vdwg.mxu0
    %v147 = vld [vmem:[#allocation5] sm:$0xff]
    %vm148 = vcmp.ge.f32.partialorder %v147, 0.3
    %v149 = vmul.f32 %v142, 1.4285715
    %v150 = vsel %vm148, %v149, 0.0
    %vm151 = vcmp.eq.f32.partialorder %v150, 0.0
    %v152 = vsel %vm151, 1, 0
    %v153 = vcvt.s32.f32 %v152
    %vm154 = vcmask 261120
    %v155 = vsel %vm154, %v153, 0.0
    %156 = vadd.xlane.f32.xlu0 %v155
    %v157 = vpop.xlane.xlu0 %156
    %v158 = vsub.f32 32.0, %v157
    %v159 = vmul.f32 %v157, -1.2039728
    %v160 = vmul.f32 %v158, -0.35667494
    %v161 = vadd.f32 %v159, %v160
    %v162 = vtanh.pop %v150
    %v163 = vpack.c.bf16 %v162, %v162
    %v164 = vld [vmem:[#allocation8] sm:$0xf]
    %v165 = vld [vmem:[#allocation8 + $0x4] sm:$0xf]
    %v166 = vld [vmem:[#allocation8 + $0x8] sm:$0xf]
    %v167 = vld [vmem:[#allocation8 + $0xc] sm:$0xf]
    %v168 = vld [vmem:[%s5] sm:$0x1]
    %v170 = vlaneseq
    %v171 = vshrl.u32 %v170, 7
    %v172 = vsub.s32 0, %v171
    %v173 = vrot.slane %v168, %v172
    %v179 = vunpack.c.l.b16 %v164
    %v180 = vunpack.c.l.b16 %v165
    %v181 = vunpack.c.l.b16 %v166
    %v182 = vunpack.c.l.b16 %v167
    %v183 = vpack.c.b16 %v180, %v179
    %v184 = vpack.c.b16 %v182, %v181
    %v188 = vsel %vm154, %v163, 0
    %190 = vmatprep.subr.bf16.mxu0 0
    %191 = vmatpush1.bf16.msra.mxu0 %v183
    %192 = vmatprep.subr.bf16.mxu0 0
    %193 = vmatpush1.bf16.msra.mxu0 %v184
    %194 = vmatprep.subr.bf16.mxu0 0
    %195 = vmatpush1.bf16.msra.mxu0 0
    %196 = vmatprep.subr.bf16.mxu0 0
    %197 = vmatpush1.bf16.msra.mxu0 0
    %198 = vmatprep.subr.bf16.mxu0 0
    %199 = vmatpush1.bf16.msra.mxu0 0
    %200 = vmatprep.subr.bf16.mxu0 0
    %201 = vmatpush1.bf16.msra.mxu0 0
    %202 = vmatprep.subr.bf16.mxu0 0
    %203 = vmatpush1.bf16.msra.mxu0 0
    %204 = vmatprep.subr.bf16.mxu0 0
    %205 = vmatpush1.bf16.msra.mxu0 0
    %206 = vmatprep.subr.bf16.mxu0 0
    %207 = vmatpush1.bf16.msra.mxu0 0
    %208 = vmatprep.subr.bf16.mxu0 0
    %209 = vmatpush1.bf16.msra.mxu0 0
    %210 = vmatprep.subr.bf16.mxu0 0
    %211 = vmatpush1.bf16.msra.mxu0 0
    %212 = vmatprep.subr.bf16.mxu0 0
    %213 = vmatpush1.bf16.msra.mxu0 0
    %214 = vmatprep.subr.bf16.mxu0 0
    %215 = vmatpush1.bf16.msra.mxu0 0
    %216 = vmatprep.subr.bf16.mxu0 0
    %217 = vmatpush1.bf16.msra.mxu0 0
    %218 = vmatprep.subr.bf16.mxu0 0
    %219 = vmatpush1.bf16.msra.mxu0 0
    %220 = vmatprep.subr.bf16.mxu0 0
    %221 = vmatpush1.bf16.msra.mxu0 0
    %222 = vmatprep.mubr.bf16.mxu0 0
    %223 = vmatmul.mubr.bf16.gmra.mrb[0].mxu0 %v188
    %v224 = vpop.f32.mrb[0].mxu0
    %v225 = vadd.f32 %v173, %v224
    %v226 = vpop.f32.mrb[0].mxu0
    %v227 = vpop.f32.mrb[0].mxu0
    %v228 = vpop.f32.mrb[0].mxu0
    %229 = vdwg.mxu0
    %s230 = scalar_lea.vmem [#allocation5], 8
    %v231 = vld [vmem:[%s230] sm:$0xff]
    %vm232 = vcmp.ge.f32.partialorder %v231, 0.3
    %v233 = vmul.f32 %v225, 1.4285715
    %v234 = vsel %vm232, %v233, 0.0
    %vm235 = vcmp.eq.f32.partialorder %v234, 0.0
    %v236 = vsel %vm235, 1, 0
    %v237 = vcvt.s32.f32 %v236
    %v238 = vsel %vm154, %v237, 0.0
    %239 = vadd.xlane.f32.xlu0 %v238
    %v240 = vpop.xlane.xlu0 %239
    %v241 = vsub.f32 32.0, %v240
    %v242 = vmul.f32 %v240, -1.2039728
    %v243 = vmul.f32 %v241, -0.35667494
    %v244 = vadd.f32 %v242, %v243
    %v245 = vadd.f32 %v161, %v244
    %v246 = vtanh.pop %v234
    %v247 = vpack.c.bf16 %v246, %v246
    %v248 = vld [vmem:[%s6] sm:$0xf]
    %v249 = vld [vmem:[%s6 + $0x4] sm:$0xf]
    %v250 = vld [vmem:[%s6 + $0x8] sm:$0xf]
    %v251 = vld [vmem:[%s6 + $0xc] sm:$0xf]
    %v252 = vld [vmem:[%s7] sm:$0x1]
    %v254 = vlaneseq
    %v255 = vshrl.u32 %v254, 7
    %v256 = vsub.s32 0, %v255
    %v257 = vrot.slane %v252, %v256
    %v263 = vunpack.c.l.b16 %v248
    %v264 = vunpack.c.l.b16 %v249
    %v265 = vunpack.c.l.b16 %v250
    %v266 = vunpack.c.l.b16 %v251
    %v267 = vpack.c.b16 %v264, %v263
    %v268 = vpack.c.b16 %v266, %v265
    %v272 = vsel %vm154, %v247, 0
    %274 = vmatprep.subr.bf16.mxu0 0
    %275 = vmatpush1.bf16.msra.mxu0 %v267
    %276 = vmatprep.subr.bf16.mxu0 0
    %277 = vmatpush1.bf16.msra.mxu0 %v268
    %278 = vmatprep.subr.bf16.mxu0 0
    %279 = vmatpush1.bf16.msra.mxu0 0
    %280 = vmatprep.subr.bf16.mxu0 0
    %281 = vmatpush1.bf16.msra.mxu0 0
    %282 = vmatprep.subr.bf16.mxu0 0
    %283 = vmatpush1.bf16.msra.mxu0 0
    %284 = vmatprep.subr.bf16.mxu0 0
    %285 = vmatpush1.bf16.msra.mxu0 0
    %286 = vmatprep.subr.bf16.mxu0 0
    %287 = vmatpush1.bf16.msra.mxu0 0
    %288 = vmatprep.subr.bf16.mxu0 0
    %289 = vmatpush1.bf16.msra.mxu0 0
    %290 = vmatprep.subr.bf16.mxu0 0
    %291 = vmatpush1.bf16.msra.mxu0 0
    %292 = vmatprep.subr.bf16.mxu0 0
    %293 = vmatpush1.bf16.msra.mxu0 0
    %294 = vmatprep.subr.bf16.mxu0 0
    %295 = vmatpush1.bf16.msra.mxu0 0
    %296 = vmatprep.subr.bf16.mxu0 0
    %297 = vmatpush1.bf16.msra.mxu0 0
    %298 = vmatprep.subr.bf16.mxu0 0
    %299 = vmatpush1.bf16.msra.mxu0 0
    %300 = vmatprep.subr.bf16.mxu0 0
    %301 = vmatpush1.bf16.msra.mxu0 0
    %302 = vmatprep.subr.bf16.mxu0 0
    %303 = vmatpush1.bf16.msra.mxu0 0
    %304 = vmatprep.subr.bf16.mxu0 0
    %305 = vmatpush1.bf16.msra.mxu0 0
    %306 = vmatprep.mubr.bf16.mxu0 0
    %307 = vmatmul.mubr.bf16.gmra.mrb[0].mxu0 %v272
    %v308 = vpop.f32.mrb[0].mxu0
    %v309 = vadd.f32 %v257, %v308
    %v310 = vpop.f32.mrb[0].mxu0
    %v311 = vpop.f32.mrb[0].mxu0
    %v312 = vpop.f32.mrb[0].mxu0
    %313 = vdwg.mxu0
    %v314 = vlaneseq
    %v315 = vand.u32 %v314, 127
    %v316 = vmul.f32 %v245, 1.442695
    %v317 = vpow.pop %v316
    %vm318 = vcmp.lt.s32.totalorder %v315, 4
    %vm319 = vcmp.lt.s32.totalorder %v315, 8
    %v320 = vmul.f32 %v309, 1.442695
    %v321 = vpow.pop %v320
    %vm322 = vcmp.eq.s32.totalorder %v315, 8
    %v323 = vsel %vm322, %v317, 0.0
    %v324 = vsel %vm319, %v321, %v323
    %v325 = vsel %vm318, %v309, %v324
    %326 = vst [vmem:[#allocation10] sm:$0xff] %v325
    // Predicated region
    $region50: #{tpu_custom_call.1} parent=1 // pred_check
      _
    $region51: #{tpu_custom_call.1} parent=1 // pred_check_branch
      %328 = sbr.rel (0) target = $region53
    $region52: #{tpu_custom_call.1} parent=1 // pred_region
      %s330 = ssub.s32 128, 128
      %331 = vsyncadd [#allocation4], %s330
      %s333 = sshll.u32 [#allocation10], 4
      %s334 = int_to_ptr.vmem [resolvable:$true] %s333
      %336 = dma.vmem_to_hbm [thread:$0]  %s334, 128, %s8, [#allocation4]
    $region53: #{tpu_custom_call.1} parent=1 // pred_fallthru
      _
    // Predicated region
    $region54: #{tpu_custom_call.1} parent=1 // pred_check
      _
    $region55: #{tpu_custom_call.1} parent=1 // pred_check_branch
      %338 = sbr.rel (0) target = $region57
    $region56: #{tpu_custom_call.1} parent=1 // pred_region
      %339 = dma.done [#allocation4], 128
    $region57: #{tpu_custom_call.1} parent=1 // pred_fallthru
      _
    %340 = vsyncpa [#allocation3], 1
    %341 = vsyncpa [#allocation6], 1
    %342 = vsyncpa [#allocation9], 1
    %343 = vsyncpa [#allocation4], 1

</llo_original>
